<compile_context>
chip_gen: v7x
topology: tpu7x:2x2x1
jax: 0.10.0
libtpu: 0.0.40
codegen_flags: <defaults>
</compile_context>

<pallas_src>
import functools

import jax
import jax.numpy as jnp
from jax.experimental import pallas as pl
from jax.experimental.pallas import tpu as pltpu


def _round_up(n, m):
    return ((n + m - 1) // m) * m


def _actor_kernel(x_ref, wih_ref, whh_ref, b_ref, wfc_ref, bfc_ref,
                  out_ref, hs_ref, *, seq_len, batch_pad):
    """x_ref: (T*Bp, Dp); weights pre-transposed & zero-padded;
    out_ref: (T*Bp, Op); hs_ref scratch: (T*Bp, Hp)."""
    # Hoisted input projection: one MXU matmul for all timesteps at once.
    #   xp[t*Bp:(t+1)*Bp, :] = x_t @ W_ih^T + (b_ih + b_hh)
    xp = jnp.dot(x_ref[...], wih_ref[...],
                 preferred_element_type=jnp.float32) + b_ref[...]

    whh = whh_ref[...]                                   # (Hp, Hp), hoisted load
    h = jnp.zeros((batch_pad, whh.shape[0]), jnp.float32)

    # Recurrence: one small matmul + one tanh (EUP) per step on the serial
    # critical path.  Slices / stores are exact (8, 128k) tiles -> unmasked.
    for t in range(seq_len):                             # static, fully unrolled
        lo = t * batch_pad                               # tile-aligned (Bp % 8 == 0)
        h = jnp.tanh(xp[lo:lo + batch_pad, :]
                     + jnp.dot(h, whh, preferred_element_type=jnp.float32))
        hs_ref[lo:lo + batch_pad, :] = h

    # FC head hoisted out of the loop: one matmul over the whole hidden slab,
    # written as a single lane-dense (128-multiple, unmasked) store.
    out_ref[...] = (jnp.dot(hs_ref[...], wfc_ref[...],
                            preferred_element_type=jnp.float32)
                    + bfc_ref[...])


def actor_net_forward(x, w_ih, w_hh, b_ih, b_hh, w_fc, b_fc):
    """x: (T, B, D_in); weights in PyTorch convention:
       w_ih: (H, D_in), w_hh: (H, H), w_fc: (D_out, H)."""
    T, B, D_in = x.shape
    H = w_ih.shape[0]
    D_out = w_fc.shape[0]

    Bp = _round_up(B, 8)        # sublane multiple -> aligned per-step slices
    Hp = _round_up(H, 128)      # lane multiple    -> unmasked hidden-slab stores
    Dp = _round_up(D_in, 128)   # lane multiple    -> lane-dense input loads
    Op = _round_up(D_out, 128)  # lane multiple    -> unmasked output store

    x = jnp.asarray(x, jnp.float32)
    x_pad = jnp.zeros((T, Bp, Dp), jnp.float32).at[:, :B, :D_in].set(x)
    x2d = x_pad.reshape(T * Bp, Dp)

    # Glue in plain JAX: pre-transpose + zero-pad weights so every in-kernel
    # matmul operand is row-major and (8,128)-tile aligned.  Zero padding is
    # exact: padded hidden units get tanh(0) = 0 and never feed real outputs.
    wih_t = jnp.zeros((Dp, Hp), jnp.float32).at[:D_in, :H].set(
        jnp.asarray(w_ih, jnp.float32).T)                            # (Dp, Hp)
    whh_t = jnp.zeros((Hp, Hp), jnp.float32).at[:H, :H].set(
        jnp.asarray(w_hh, jnp.float32).T)                            # (Hp, Hp)
    b_rnn = jnp.zeros((1, Hp), jnp.float32).at[:, :H].set(
        (jnp.asarray(b_ih, jnp.float32)
         + jnp.asarray(b_hh, jnp.float32))[None, :])                 # (1, Hp)
    wfc_t = jnp.zeros((Hp, Op), jnp.float32).at[:H, :D_out].set(
        jnp.asarray(w_fc, jnp.float32).T)                            # (Hp, Op)
    bfc = jnp.zeros((1, Op), jnp.float32).at[:, :D_out].set(
        jnp.asarray(b_fc, jnp.float32)[None, :])                     # (1, Op)

    kernel = functools.partial(_actor_kernel, seq_len=T, batch_pad=Bp)

    out2d = pl.pallas_call(
        kernel,
        out_shape=jax.ShapeDtypeStruct((T * Bp, Op), jnp.float32),
        in_specs=[pl.BlockSpec(memory_space=pltpu.MemorySpace.VMEM)] * 6,
        out_specs=pl.BlockSpec(memory_space=pltpu.MemorySpace.VMEM),
        scratch_shapes=[pltpu.VMEM((T * Bp, Hp), jnp.float32)],      # hidden slab
    )(x2d, wih_t, whh_t, b_rnn, wfc_t, bfc)

    return out2d.reshape(T, Bp, Op)[:, :B, :D_out]


def actor_net_reference(x, w_ih, w_hh, b_ih, b_hh, w_fc, b_fc):
    """Pure-JAX reference matching PyTorch semantics."""
    _, B, _ = x.shape
    H = w_ih.shape[0]

    def step(h, x_t):
        h_new = jnp.tanh(x_t @ w_ih.T + b_ih + h @ w_hh.T + b_hh)
        return h_new, h_new

    h0 = jnp.zeros((B, H), jnp.float32)
    _, hs = jax.lax.scan(step, h0, x)
    return hs @ w_fc.T + b_fc


if __name__ == "__main__":
    # Small shapes consistent with the module's forward.
    T, B = 8, 2          # seq_len, batch
    D_in, H, D_out = 16, 32, 4

    key = jax.random.PRNGKey(0)
    keys = jax.random.split(key, 8)

    # Deterministic parameter init (PyTorch-style uniform(-1/sqrt(H), 1/sqrt(H))).
    bound = 1.0 / jnp.sqrt(jnp.float32(H))
    w_ih = jax.random.uniform(keys[0], (H, D_in), jnp.float32, -bound, bound)
    w_hh = jax.random.uniform(keys[1], (H, H), jnp.float32, -bound, bound)
    b_ih = jax.random.uniform(keys[2], (H,), jnp.float32, -bound, bound)
    b_hh = jax.random.uniform(keys[3], (H,), jnp.float32, -bound, bound)
    w_fc = jax.random.uniform(keys[4], (D_out, H), jnp.float32, -bound, bound)
    b_fc = jax.random.uniform(keys[5], (D_out,), jnp.float32, -bound, bound)

    x = jax.random.normal(keys[6], (T, B, D_in), jnp.float32)

    out = actor_net_forward(x, w_ih, w_hh, b_ih, b_hh, w_fc, b_fc)
    out = jax.block_until_ready(out)

    ref = actor_net_reference(x, w_ih, w_hh, b_ih, b_hh, w_fc, b_fc)
    assert out.shape == (T, B, D_out)
    assert jnp.allclose(out, ref, atol=1e-5, rtol=1e-4), "mismatch vs JAX reference"

    print("KERNEL_OK")
</pallas_src>

<mosaic_0001>
module attributes {stable_mosaic.version = 11 : i64} {
  func.func @_actor_kernel(%arg0: memref<64x128xf32, #tpu.memory_space<vmem>>, %arg1: memref<128x128xf32, #tpu.memory_space<vmem>>, %arg2: memref<128x128xf32, #tpu.memory_space<vmem>>, %arg3: memref<1x128xf32, #tpu.memory_space<vmem>>, %arg4: memref<128x128xf32, #tpu.memory_space<vmem>>, %arg5: memref<1x128xf32, #tpu.memory_space<vmem>>, %arg6: memref<64x128xf32, #tpu.memory_space<vmem>>, %arg7: memref<64x128xf32, #tpu.memory_space<vmem>>) attributes {dimension_semantics = [], scalar_prefetch = 0 : i64, scratch_operands = 1 : i64, tpu.core_type = #tpu.core_type<tc>} {
    %c0 = arith.constant 0 : index
    %c0_0 = arith.constant 0 : index
    %0 = vector.load %arg0[%c0, %c0_0] : memref<64x128xf32, #tpu.memory_space<vmem>>, vector<64x128xf32>
    %c0_1 = arith.constant 0 : index
    %c0_2 = arith.constant 0 : index
    %1 = vector.load %arg1[%c0_1, %c0_2] : memref<128x128xf32, #tpu.memory_space<vmem>>, vector<128x128xf32>
    %cst = arith.constant dense<0.000000e+00> : vector<64x128xf32>
    %2 = tpu.matmul %0, %1, %cst {dimension_numbers = #tpu.dot_dimension_numbers<[1], [0], [0], [1], [0, 0, 1, 1], [], []>} : vector<64x128xf32>, vector<128x128xf32>, vector<64x128xf32> -> vector<64x128xf32>
    %c0_3 = arith.constant 0 : index
    %c0_4 = arith.constant 0 : index
    %3 = vector.load %arg3[%c0_3, %c0_4] : memref<1x128xf32, #tpu.memory_space<vmem>>, vector<1x128xf32>
    %4 = vector.broadcast %3 : vector<1x128xf32> to vector<64x128xf32>
    %5 = arith.addf %2, %4 : vector<64x128xf32>
    %c0_5 = arith.constant 0 : index
    %c0_6 = arith.constant 0 : index
    %6 = vector.load %arg2[%c0_5, %c0_6] : memref<128x128xf32, #tpu.memory_space<vmem>>, vector<128x128xf32>
    %cst_7 = arith.constant 0.000000e+00 : f32
    %7 = vector.broadcast %cst_7 : f32 to vector<8x128xf32>
    %8 = vector.extract_strided_slice %5 {offsets = [0, 0], sizes = [8, 128], strides = [1, 1]} : vector<64x128xf32> to vector<8x128xf32>
    %cst_8 = arith.constant dense<0.000000e+00> : vector<8x128xf32>
    %9 = tpu.matmul %7, %6, %cst_8 {dimension_numbers = #tpu.dot_dimension_numbers<[1], [0], [0], [1], [0, 0, 1, 1], [], []>} : vector<8x128xf32>, vector<128x128xf32>, vector<8x128xf32> -> vector<8x128xf32>
    %10 = arith.addf %8, %9 : vector<8x128xf32>
    %11 = math.tanh %10 : vector<8x128xf32>
    %c0_9 = arith.constant 0 : index
    %c0_10 = arith.constant 0 : index
    %12 = vector.load %arg7[%c0_9, %c0_10] : memref<64x128xf32, #tpu.memory_space<vmem>>, vector<8x128xf32>
    tpu.vector_store %arg7[%c0_9, %c0_10], %11 {strides = array<i32>} : memref<64x128xf32, #tpu.memory_space<vmem>>, vector<8x128xf32>,
    %13 = vector.extract_strided_slice %5 {offsets = [8, 0], sizes = [8, 128], strides = [1, 1]} : vector<64x128xf32> to vector<8x128xf32>
    %cst_11 = arith.constant dense<0.000000e+00> : vector<8x128xf32>
    %14 = tpu.matmul %11, %6, %cst_11 {dimension_numbers = #tpu.dot_dimension_numbers<[1], [0], [0], [1], [0, 0, 1, 1], [], []>} : vector<8x128xf32>, vector<128x128xf32>, vector<8x128xf32> -> vector<8x128xf32>
    %15 = arith.addf %13, %14 : vector<8x128xf32>
    %16 = math.tanh %15 : vector<8x128xf32>
    %c8 = arith.constant 8 : index
    %c0_12 = arith.constant 0 : index
    %17 = vector.load %arg7[%c8, %c0_12] : memref<64x128xf32, #tpu.memory_space<vmem>>, vector<8x128xf32>
    tpu.vector_store %arg7[%c8, %c0_12], %16 {strides = array<i32>} : memref<64x128xf32, #tpu.memory_space<vmem>>, vector<8x128xf32>,
    %18 = vector.extract_strided_slice %5 {offsets = [16, 0], sizes = [8, 128], strides = [1, 1]} : vector<64x128xf32> to vector<8x128xf32>
    %cst_13 = arith.constant dense<0.000000e+00> : vector<8x128xf32>
    %19 = tpu.matmul %16, %6, %cst_13 {dimension_numbers = #tpu.dot_dimension_numbers<[1], [0], [0], [1], [0, 0, 1, 1], [], []>} : vector<8x128xf32>, vector<128x128xf32>, vector<8x128xf32> -> vector<8x128xf32>
    %20 = arith.addf %18, %19 : vector<8x128xf32>
    %21 = math.tanh %20 : vector<8x128xf32>
    %c16 = arith.constant 16 : index
    %c0_14 = arith.constant 0 : index
    %22 = vector.load %arg7[%c16, %c0_14] : memref<64x128xf32, #tpu.memory_space<vmem>>, vector<8x128xf32>
    tpu.vector_store %arg7[%c16, %c0_14], %21 {strides = array<i32>} : memref<64x128xf32, #tpu.memory_space<vmem>>, vector<8x128xf32>,
    %23 = vector.extract_strided_slice %5 {offsets = [24, 0], sizes = [8, 128], strides = [1, 1]} : vector<64x128xf32> to vector<8x128xf32>
    %cst_15 = arith.constant dense<0.000000e+00> : vector<8x128xf32>
    %24 = tpu.matmul %21, %6, %cst_15 {dimension_numbers = #tpu.dot_dimension_numbers<[1], [0], [0], [1], [0, 0, 1, 1], [], []>} : vector<8x128xf32>, vector<128x128xf32>, vector<8x128xf32> -> vector<8x128xf32>
    %25 = arith.addf %23, %24 : vector<8x128xf32>
    %26 = math.tanh %25 : vector<8x128xf32>
    %c24 = arith.constant 24 : index
    %c0_16 = arith.constant 0 : index
    %27 = vector.load %arg7[%c24, %c0_16] : memref<64x128xf32, #tpu.memory_space<vmem>>, vector<8x128xf32>
    tpu.vector_store %arg7[%c24, %c0_16], %26 {strides = array<i32>} : memref<64x128xf32, #tpu.memory_space<vmem>>, vector<8x128xf32>,
    %28 = vector.extract_strided_slice %5 {offsets = [32, 0], sizes = [8, 128], strides = [1, 1]} : vector<64x128xf32> to vector<8x128xf32>
    %cst_17 = arith.constant dense<0.000000e+00> : vector<8x128xf32>
    %29 = tpu.matmul %26, %6, %cst_17 {dimension_numbers = #tpu.dot_dimension_numbers<[1], [0], [0], [1], [0, 0, 1, 1], [], []>} : vector<8x128xf32>, vector<128x128xf32>, vector<8x128xf32> -> vector<8x128xf32>
    %30 = arith.addf %28, %29 : vector<8x128xf32>
    %31 = math.tanh %30 : vector<8x128xf32>
    %c32 = arith.constant 32 : index
    %c0_18 = arith.constant 0 : index
    %32 = vector.load %arg7[%c32, %c0_18] : memref<64x128xf32, #tpu.memory_space<vmem>>, vector<8x128xf32>
    tpu.vector_store %arg7[%c32, %c0_18], %31 {strides = array<i32>} : memref<64x128xf32, #tpu.memory_space<vmem>>, vector<8x128xf32>,
    %33 = vector.extract_strided_slice %5 {offsets = [40, 0], sizes = [8, 128], strides = [1, 1]} : vector<64x128xf32> to vector<8x128xf32>
    %cst_19 = arith.constant dense<0.000000e+00> : vector<8x128xf32>
    %34 = tpu.matmul %31, %6, %cst_19 {dimension_numbers = #tpu.dot_dimension_numbers<[1], [0], [0], [1], [0, 0, 1, 1], [], []>} : vector<8x128xf32>, vector<128x128xf32>, vector<8x128xf32> -> vector<8x128xf32>
    %35 = arith.addf %33, %34 : vector<8x128xf32>
    %36 = math.tanh %35 : vector<8x128xf32>
    %c40 = arith.constant 40 : index
    %c0_20 = arith.constant 0 : index
    %37 = vector.load %arg7[%c40, %c0_20] : memref<64x128xf32, #tpu.memory_space<vmem>>, vector<8x128xf32>
    tpu.vector_store %arg7[%c40, %c0_20], %36 {strides = array<i32>} : memref<64x128xf32, #tpu.memory_space<vmem>>, vector<8x128xf32>,
    %38 = vector.extract_strided_slice %5 {offsets = [48, 0], sizes = [8, 128], strides = [1, 1]} : vector<64x128xf32> to vector<8x128xf32>
    %cst_21 = arith.constant dense<0.000000e+00> : vector<8x128xf32>
    %39 = tpu.matmul %36, %6, %cst_21 {dimension_numbers = #tpu.dot_dimension_numbers<[1], [0], [0], [1], [0, 0, 1, 1], [], []>} : vector<8x128xf32>, vector<128x128xf32>, vector<8x128xf32> -> vector<8x128xf32>
    %40 = arith.addf %38, %39 : vector<8x128xf32>
    %41 = math.tanh %40 : vector<8x128xf32>
    %c48 = arith.constant 48 : index
    %c0_22 = arith.constant 0 : index
    %42 = vector.load %arg7[%c48, %c0_22] : memref<64x128xf32, #tpu.memory_space<vmem>>, vector<8x128xf32>
    tpu.vector_store %arg7[%c48, %c0_22], %41 {strides = array<i32>} : memref<64x128xf32, #tpu.memory_space<vmem>>, vector<8x128xf32>,
    %43 = vector.extract_strided_slice %5 {offsets = [56, 0], sizes = [8, 128], strides = [1, 1]} : vector<64x128xf32> to vector<8x128xf32>
    %cst_23 = arith.constant dense<0.000000e+00> : vector<8x128xf32>
    %44 = tpu.matmul %41, %6, %cst_23 {dimension_numbers = #tpu.dot_dimension_numbers<[1], [0], [0], [1], [0, 0, 1, 1], [], []>} : vector<8x128xf32>, vector<128x128xf32>, vector<8x128xf32> -> vector<8x128xf32>
    %45 = arith.addf %43, %44 : vector<8x128xf32>
    %46 = math.tanh %45 : vector<8x128xf32>
    %c56 = arith.constant 56 : index
    %c0_24 = arith.constant 0 : index
    %47 = vector.load %arg7[%c56, %c0_24] : memref<64x128xf32, #tpu.memory_space<vmem>>, vector<8x128xf32>
    tpu.vector_store %arg7[%c56, %c0_24], %46 {strides = array<i32>} : memref<64x128xf32, #tpu.memory_space<vmem>>, vector<8x128xf32>,
    %c0_25 = arith.constant 0 : index
    %c0_26 = arith.constant 0 : index
    %48 = vector.load %arg7[%c0_25, %c0_26] : memref<64x128xf32, #tpu.memory_space<vmem>>, vector<64x128xf32>
    %c0_27 = arith.constant 0 : index
    %c0_28 = arith.constant 0 : index
    %49 = vector.load %arg4[%c0_27, %c0_28] : memref<128x128xf32, #tpu.memory_space<vmem>>, vector<128x128xf32>
    %cst_29 = arith.constant dense<0.000000e+00> : vector<64x128xf32>
    %50 = tpu.matmul %48, %49, %cst_29 {dimension_numbers = #tpu.dot_dimension_numbers<[1], [0], [0], [1], [0, 0, 1, 1], [], []>} : vector<64x128xf32>, vector<128x128xf32>, vector<64x128xf32> -> vector<64x128xf32>
    %c0_30 = arith.constant 0 : index
    %c0_31 = arith.constant 0 : index
    %51 = vector.load %arg5[%c0_30, %c0_31] : memref<1x128xf32, #tpu.memory_space<vmem>>, vector<1x128xf32>
    %52 = vector.broadcast %51 : vector<1x128xf32> to vector<64x128xf32>
    %53 = arith.addf %50, %52 : vector<64x128xf32>
    %c0_32 = arith.constant 0 : index
    %c0_33 = arith.constant 0 : index
    %54 = vector.load %arg6[%c0_32, %c0_33] : memref<64x128xf32, #tpu.memory_space<vmem>>, vector<64x128xf32>
    tpu.vector_store %arg6[%c0_32, %c0_33], %53 {strides = array<i32>} : memref<64x128xf32, #tpu.memory_space<vmem>>, vector<64x128xf32>,
    return
  }
}

</mosaic_0001>

<llo_original>
// kernel: tpu_custom_call.1
$region0: #{tpu_custom_call.1}
  #allocation0 [shape = 'u32[]', space=smem, size = 0x4, offset = 0x4, fixed_abs, tag = 'smem constant byte address 0x4 - core index']
  #allocation1 [shape = 'u32[144,128]{1,0:T(1,128)}', space=vmem, size = 0x12000, scoped, tag = 'internal scratch']
  #allocation2 [shape = 'f32[64,128]{1,0:T(8,128)}', space=vmem, size = 0x8000, scoped, tag = 'scratch operand']
  %s0 = inlined_call_operand.hbm [shape: f32[64,128], index: 0, kind: input, shape index: {}]
  %s1 = inlined_call_operand.hbm [shape: f32[128,128], index: 1, kind: input, shape index: {}]
  %s2 = inlined_call_operand.hbm [shape: f32[128,128], index: 2, kind: input, shape index: {}]
  %s3 = inlined_call_operand.vmem [shape: f32[1,128], index: 3, kind: input, shape index: {}]
  %s4 = inlined_call_operand.hbm [shape: f32[128,128], index: 4, kind: input, shape index: {}]
  %s5 = inlined_call_operand.vmem [shape: f32[1,128], index: 5, kind: input, shape index: {}]
  %s6 = inlined_call_operand.hbm [shape: f32[64,128], index: 6, kind: output, shape index: {}]
  %s7 = sld [smem:[#allocation0]]
  $region50: #{tpu_custom_call.1} parent=0
    _
  %s9 = ssub.s32 1, %s7
  %s10 = scalar_select 0, %s9, %s7
  $region1: #{tpu_custom_call.1} parent=0
    #allocation3 [shape = 'u8[32768]{0}', space=vmem, size = 0x8000, scoped, tag = 'input window, operand 0, single buffered']
    #allocation4 [shape = 's32[1]{0}', space=sflag, size = 0x4, scoped, tag = 'scoped memory for tpu_custom_call.1']
    #allocation5 [shape = 's32[1]{0}', space=sflag, size = 0x4, scoped, tag = 'scoped memory for tpu_custom_call.1']
    #allocation6 [shape = 'u8[65536]{0}', space=vmem, size = 0x10000, scoped, tag = 'input window, operand 1, single buffered']
    #allocation7 [shape = 's32[1]{0}', space=sflag, size = 0x4, scoped, tag = 'scoped memory for tpu_custom_call.1']
    #allocation8 [shape = 'u8[65536]{0}', space=vmem, size = 0x10000, scoped, tag = 'input window, operand 2, single buffered']
    #allocation9 [shape = 'u8[65536]{0}', space=vmem, size = 0x10000, scoped, tag = 'input window, operand 4, single buffered']
    #allocation10 [shape = 's32[1]{0}', space=sflag, size = 0x4, scoped, tag = 'scoped memory for tpu_custom_call.1']
    #allocation11 [shape = 'u8[32768]{0}', space=vmem, size = 0x8000, scoped, tag = 'output window, operand 0, single buffered']
    %11 = vsyncpa [#allocation4], 0
    %12 = vsyncpa [#allocation7], 0
    %13 = vsyncpa [#allocation10], 0
    %14 = vsyncpa [#allocation5], 0
    // Predicated region
    $region2: #{tpu_custom_call.1} parent=1 // pred_check
      _
    $region3: #{tpu_custom_call.1} parent=1 // pred_check_branch
      %16 = sbr.rel (0) target = $region5
    $region4: #{tpu_custom_call.1} parent=1 // pred_region
      %s18 = ssub.s32 1024, 1024
      %19 = vsyncadd [#allocation4], %s18
      %s20 = sshll.u32 [#allocation3], 4
      %s21 = int_to_ptr.vmem [resolvable:$true] %s20
      %26 = dma.hbm_to_vmem [thread:$0]  %s0, 1024, %s21, [#allocation4], 128, 128, 8
    $region5: #{tpu_custom_call.1} parent=1 // pred_fallthru
      _
    // Predicated region
    $region6: #{tpu_custom_call.1} parent=1 // pred_check
      _
    $region7: #{tpu_custom_call.1} parent=1 // pred_check_branch
      %28 = sbr.rel (0) target = $region9
    $region8: #{tpu_custom_call.1} parent=1 // pred_region
      %s30 = ssub.s32 2048, 2048
      %31 = vsyncadd [#allocation7], %s30
      %s32 = sshll.u32 [#allocation6], 4
      %s33 = int_to_ptr.vmem [resolvable:$true] %s32
      %38 = dma.hbm_to_vmem [thread:$0]  %s1, 2048, %s33, [#allocation7], 128, 128, 8
    $region9: #{tpu_custom_call.1} parent=1 // pred_fallthru
      _
    // Predicated region
    $region10: #{tpu_custom_call.1} parent=1 // pred_check
      _
    $region11: #{tpu_custom_call.1} parent=1 // pred_check_branch
      %40 = sbr.rel (0) target = $region13
    $region12: #{tpu_custom_call.1} parent=1 // pred_region
      %s42 = ssub.s32 2048, 2048
      %43 = vsyncadd [#allocation7], %s42
      %s44 = sshll.u32 [#allocation8], 4
      %s45 = int_to_ptr.vmem [resolvable:$true] %s44
      %50 = dma.hbm_to_vmem [thread:$0]  %s2, 2048, %s45, [#allocation7], 128, 128, 8
    $region13: #{tpu_custom_call.1} parent=1 // pred_fallthru
      _
    // Predicated region
    $region14: #{tpu_custom_call.1} parent=1 // pred_check
      _
    $region15: #{tpu_custom_call.1} parent=1 // pred_check_branch
      %52 = sbr.rel (0) target = $region17
    $region16: #{tpu_custom_call.1} parent=1 // pred_region
      _
    $region17: #{tpu_custom_call.1} parent=1 // pred_fallthru
      _
    // Predicated region
    $region18: #{tpu_custom_call.1} parent=1 // pred_check
      _
    $region19: #{tpu_custom_call.1} parent=1 // pred_check_branch
      %54 = sbr.rel (0) target = $region21
    $region20: #{tpu_custom_call.1} parent=1 // pred_region
      %s56 = ssub.s32 2048, 2048
      %57 = vsyncadd [#allocation10], %s56
      %s58 = sshll.u32 [#allocation9], 4
      %s59 = int_to_ptr.vmem [resolvable:$true] %s58
      %64 = dma.hbm_to_vmem [thread:$0]  %s4, 2048, %s59, [#allocation10], 128, 128, 8
    $region21: #{tpu_custom_call.1} parent=1 // pred_fallthru
      _
    // Predicated region
    $region22: #{tpu_custom_call.1} parent=1 // pred_check
      _
    $region23: #{tpu_custom_call.1} parent=1 // pred_check_branch
      %66 = sbr.rel (0) target = $region25
    $region24: #{tpu_custom_call.1} parent=1 // pred_region
      _
    $region25: #{tpu_custom_call.1} parent=1 // pred_fallthru
      _
    // Predicated region
    $region26: #{tpu_custom_call.1} parent=1 // pred_check
      _
    $region27: #{tpu_custom_call.1} parent=1 // pred_check_branch
      %68 = sbr.rel (0) target = $region29
    $region28: #{tpu_custom_call.1} parent=1 // pred_region
      %69 = dma.done [#allocation4], 1024
    $region29: #{tpu_custom_call.1} parent=1 // pred_fallthru
      _
    // Predicated region
    $region30: #{tpu_custom_call.1} parent=1 // pred_check
      _
    $region31: #{tpu_custom_call.1} parent=1 // pred_check_branch
      %71 = sbr.rel (0) target = $region33
    $region32: #{tpu_custom_call.1} parent=1 // pred_region
      %72 = dma.done [#allocation7], 2048
    $region33: #{tpu_custom_call.1} parent=1 // pred_fallthru
      _
    // Predicated region
    $region34: #{tpu_custom_call.1} parent=1 // pred_check
      _
    $region35: #{tpu_custom_call.1} parent=1 // pred_check_branch
      %74 = sbr.rel (0) target = $region37
    $region36: #{tpu_custom_call.1} parent=1 // pred_region
      %75 = dma.done [#allocation7], 2048
    $region37: #{tpu_custom_call.1} parent=1 // pred_fallthru
      _
    // Predicated region
    $region38: #{tpu_custom_call.1} parent=1 // pred_check
      _
    $region39: #{tpu_custom_call.1} parent=1 // pred_check_branch
      %77 = sbr.rel (0) target = $region41
    $region40: #{tpu_custom_call.1} parent=1 // pred_region
      %78 = dma.done [#allocation10], 2048
    $region41: #{tpu_custom_call.1} parent=1 // pred_fallthru
      _
    %v79 = vld [vmem:[#allocation3] sm:$0xff]
    %v80 = vld [vmem:[#allocation3 + $0x8] sm:$0xff]
    %v81 = vld [vmem:[#allocation3 + $0x10] sm:$0xff]
    %v82 = vld [vmem:[#allocation3 + $0x18] sm:$0xff]
    %v83 = vld [vmem:[#allocation3 + $0x20] sm:$0xff]
    %v84 = vld [vmem:[#allocation3 + $0x28] sm:$0xff]
    %v85 = vld [vmem:[#allocation3 + $0x30] sm:$0xff]
    %v86 = vld [vmem:[#allocation3 + $0x38] sm:$0xff]
    %v87 = vld [vmem:[#allocation6] sm:$0xff]
    %v88 = vld [vmem:[#allocation6 + $0x8] sm:$0xff]
    %v89 = vld [vmem:[#allocation6 + $0x10] sm:$0xff]
    %v90 = vld [vmem:[#allocation6 + $0x18] sm:$0xff]
    %v91 = vld [vmem:[#allocation6 + $0x20] sm:$0xff]
    %v92 = vld [vmem:[#allocation6 + $0x28] sm:$0xff]
    %v93 = vld [vmem:[#allocation6 + $0x30] sm:$0xff]
    %v94 = vld [vmem:[#allocation6 + $0x38] sm:$0xff]
    %v95 = vld [vmem:[#allocation6 + $0x40] sm:$0xff]
    %v96 = vld [vmem:[#allocation6 + $0x48] sm:$0xff]
    %v97 = vld [vmem:[#allocation6 + $0x50] sm:$0xff]
    %v98 = vld [vmem:[#allocation6 + $0x58] sm:$0xff]
    %v99 = vld [vmem:[#allocation6 + $0x60] sm:$0xff]
    %v100 = vld [vmem:[#allocation6 + $0x68] sm:$0xff]
    %v101 = vld [vmem:[#allocation6 + $0x70] sm:$0xff]
    %v102 = vld [vmem:[#allocation6 + $0x78] sm:$0xff]
    %v103 = vld [vmem:[%s3] sm:$0x1]
    %v105 = vlaneseq
    %v106 = vshrl.u32 %v105, 7
    %v107 = vsub.s32 0, %v106
    %v108 = vrot.slane %v103, %v107
    %110 = vmatprep.subr.mxu0 0.0
    %111 = vmatpush1.msra.mxu0 %v87
    %112 = vmatprep.subr.mxu0 0.0
    %113 = vmatpush1.msra.mxu0 %v88
    %114 = vmatprep.subr.mxu0 0.0
    %115 = vmatpush1.msra.mxu0 %v89
    %116 = vmatprep.subr.mxu0 0.0
    %117 = vmatpush1.msra.mxu0 %v90
    %118 = vmatprep.subr.mxu0 0.0
    %119 = vmatpush1.msra.mxu0 %v91
    %120 = vmatprep.subr.mxu0 0.0
    %121 = vmatpush1.msra.mxu0 %v92
    %122 = vmatprep.subr.mxu0 0.0
    %123 = vmatpush1.msra.mxu0 %v93
    %124 = vmatprep.subr.mxu0 0.0
    %125 = vmatpush1.msra.mxu0 %v94
    %126 = vmatprep.subr.mxu0 0.0
    %127 = vmatpush1.msra.mxu0 %v95
    %128 = vmatprep.subr.mxu0 0.0
    %129 = vmatpush1.msra.mxu0 %v96
    %130 = vmatprep.subr.mxu0 0.0
    %131 = vmatpush1.msra.mxu0 %v97
    %132 = vmatprep.subr.mxu0 0.0
    %133 = vmatpush1.msra.mxu0 %v98
    %134 = vmatprep.subr.mxu0 0.0
    %135 = vmatpush1.msra.mxu0 %v99
    %136 = vmatprep.subr.mxu0 0.0
    %137 = vmatpush1.msra.mxu0 %v100
    %138 = vmatprep.subr.mxu0 0.0
    %139 = vmatpush1.msra.mxu0 %v101
    %140 = vmatprep.subr.mxu0 0.0
    %141 = vmatpush1.msra.mxu0 %v102
    %142 = vmatprep.subr.mxu0 0.0
    %143 = vmatpush1.msra.mxu0 0.0
    %144 = vmatprep.subr.mxu0 0.0
    %145 = vmatpush1.msra.mxu0 0.0
    %146 = vmatprep.subr.mxu0 0.0
    %147 = vmatpush1.msra.mxu0 0.0
    %148 = vmatprep.subr.mxu0 0.0
    %149 = vmatpush1.msra.mxu0 0.0
    %150 = vmatprep.subr.mxu0 0.0
    %151 = vmatpush1.msra.mxu0 0.0
    %152 = vmatprep.subr.mxu0 0.0
    %153 = vmatpush1.msra.mxu0 0.0
    %154 = vmatprep.subr.mxu0 0.0
    %155 = vmatpush1.msra.mxu0 0.0
    %156 = vmatprep.subr.mxu0 0.0
    %157 = vmatpush1.msra.mxu0 0.0
    %158 = vmatprep.subr.mxu0 0.0
    %159 = vmatpush1.msra.mxu0 0.0
    %160 = vmatprep.subr.mxu0 0.0
    %161 = vmatpush1.msra.mxu0 0.0
    %162 = vmatprep.subr.mxu0 0.0
    %163 = vmatpush1.msra.mxu0 0.0
    %164 = vmatprep.subr.mxu0 0.0
    %165 = vmatpush1.msra.mxu0 0.0
    %166 = vmatprep.subr.mxu0 0.0
    %167 = vmatpush1.msra.mxu0 0.0
    %168 = vmatprep.subr.mxu0 0.0
    %169 = vmatpush1.msra.mxu0 0.0
    %170 = vmatprep.subr.mxu0 0.0
    %171 = vmatpush1.msra.mxu0 0.0
    %172 = vmatprep.subr.mxu0 0.0
    %173 = vmatpush1.msra.mxu0 0.0
    %174 = vmatprep.mubr.f32.mxu0 0.0
    %175 = vmatmul.mubr.f32.gmra.mrb[0].mxu0 %v79
    %v176 = vpop.f32.mrb[0].mxu0
    %v177 = vadd.f32 %v108, %v176
    %v178 = vpop.f32.mrb[0].mxu0
    %179 = vmatprep.mubr.f32.mxu0 0.0
    %180 = vmatmul.mubr.f32.gmra.mrb[0].mxu0 %v80
    %v181 = vpop.f32.mrb[0].mxu0
    %v182 = vadd.f32 %v108, %v181
    %v183 = vpop.f32.mrb[0].mxu0
    %184 = vmatprep.mubr.f32.mxu0 0.0
    %185 = vmatmul.mubr.f32.gmra.mrb[0].mxu0 %v81
    %v186 = vpop.f32.mrb[0].mxu0
    %v187 = vadd.f32 %v108, %v186
    %v188 = vpop.f32.mrb[0].mxu0
    %189 = vmatprep.mubr.f32.mxu0 0.0
    %190 = vmatmul.mubr.f32.gmra.mrb[0].mxu0 %v82
    %v191 = vpop.f32.mrb[0].mxu0
    %v192 = vadd.f32 %v108, %v191
    %v193 = vpop.f32.mrb[0].mxu0
    %194 = vmatprep.mubr.f32.mxu0 0.0
    %195 = vmatmul.mubr.f32.gmra.mrb[0].mxu0 %v83
    %v196 = vpop.f32.mrb[0].mxu0
    %v197 = vadd.f32 %v108, %v196
    %v198 = vpop.f32.mrb[0].mxu0
    %199 = vmatprep.mubr.f32.mxu0 0.0
    %200 = vmatmul.mubr.f32.gmra.mrb[0].mxu0 %v84
    %v201 = vpop.f32.mrb[0].mxu0
    %v202 = vadd.f32 %v108, %v201
    %v203 = vpop.f32.mrb[0].mxu0
    %204 = vmatprep.mubr.f32.mxu0 0.0
    %205 = vmatmul.mubr.f32.gmra.mrb[0].mxu0 %v85
    %v206 = vpop.f32.mrb[0].mxu0
    %v207 = vadd.f32 %v108, %v206
    %v208 = vpop.f32.mrb[0].mxu0
    %209 = vmatprep.mubr.f32.mxu0 0.0
    %210 = vmatmul.mubr.f32.gmra.mrb[0].mxu0 %v86
    %v211 = vpop.f32.mrb[0].mxu0
    %v212 = vadd.f32 %v108, %v211
    %v213 = vpop.f32.mrb[0].mxu0
    %214 = vdwg.mxu0
    %v215 = vld [vmem:[#allocation8] sm:$0xff]
    %v216 = vld [vmem:[#allocation8 + $0x8] sm:$0xff]
    %v217 = vld [vmem:[#allocation8 + $0x10] sm:$0xff]
    %v218 = vld [vmem:[#allocation8 + $0x18] sm:$0xff]
    %v219 = vld [vmem:[#allocation8 + $0x20] sm:$0xff]
    %v220 = vld [vmem:[#allocation8 + $0x28] sm:$0xff]
    %v221 = vld [vmem:[#allocation8 + $0x30] sm:$0xff]
    %v222 = vld [vmem:[#allocation8 + $0x38] sm:$0xff]
    %v223 = vld [vmem:[#allocation8 + $0x40] sm:$0xff]
    %v224 = vld [vmem:[#allocation8 + $0x48] sm:$0xff]
    %v225 = vld [vmem:[#allocation8 + $0x50] sm:$0xff]
    %v226 = vld [vmem:[#allocation8 + $0x58] sm:$0xff]
    %v227 = vld [vmem:[#allocation8 + $0x60] sm:$0xff]
    %v228 = vld [vmem:[#allocation8 + $0x68] sm:$0xff]
    %v229 = vld [vmem:[#allocation8 + $0x70] sm:$0xff]
    %v230 = vld [vmem:[#allocation8 + $0x78] sm:$0xff]
    %231 = vmatprep.subr.mxu0 0.0
    %232 = vmatpush1.msra.mxu0 %v215
    %233 = vmatprep.subr.mxu0 0.0
    %234 = vmatpush1.msra.mxu0 %v216
    %235 = vmatprep.subr.mxu0 0.0
    %236 = vmatpush1.msra.mxu0 %v217
    %237 = vmatprep.subr.mxu0 0.0
    %238 = vmatpush1.msra.mxu0 %v218
    %239 = vmatprep.subr.mxu0 0.0
    %240 = vmatpush1.msra.mxu0 %v219
    %241 = vmatprep.subr.mxu0 0.0
    %242 = vmatpush1.msra.mxu0 %v220
    %243 = vmatprep.subr.mxu0 0.0
    %244 = vmatpush1.msra.mxu0 %v221
    %245 = vmatprep.subr.mxu0 0.0
    %246 = vmatpush1.msra.mxu0 %v222
    %247 = vmatprep.subr.mxu0 0.0
    %248 = vmatpush1.msra.mxu0 %v223
    %249 = vmatprep.subr.mxu0 0.0
    %250 = vmatpush1.msra.mxu0 %v224
    %251 = vmatprep.subr.mxu0 0.0
    %252 = vmatpush1.msra.mxu0 %v225
    %253 = vmatprep.subr.mxu0 0.0
    %254 = vmatpush1.msra.mxu0 %v226
    %255 = vmatprep.subr.mxu0 0.0
    %256 = vmatpush1.msra.mxu0 %v227
    %257 = vmatprep.subr.mxu0 0.0
    %258 = vmatpush1.msra.mxu0 %v228
    %259 = vmatprep.subr.mxu0 0.0
    %260 = vmatpush1.msra.mxu0 %v229
    %261 = vmatprep.subr.mxu0 0.0
    %262 = vmatpush1.msra.mxu0 %v230
    %263 = vmatprep.subr.mxu0 0.0
    %264 = vmatpush1.msra.mxu0 0.0
    %265 = vmatprep.subr.mxu0 0.0
    %266 = vmatpush1.msra.mxu0 0.0
    %267 = vmatprep.subr.mxu0 0.0
    %268 = vmatpush1.msra.mxu0 0.0
    %269 = vmatprep.subr.mxu0 0.0
    %270 = vmatpush1.msra.mxu0 0.0
    %271 = vmatprep.subr.mxu0 0.0
    %272 = vmatpush1.msra.mxu0 0.0
    %273 = vmatprep.subr.mxu0 0.0
    %274 = vmatpush1.msra.mxu0 0.0
    %275 = vmatprep.subr.mxu0 0.0
    %276 = vmatpush1.msra.mxu0 0.0
    %277 = vmatprep.subr.mxu0 0.0
    %278 = vmatpush1.msra.mxu0 0.0
    %279 = vmatprep.subr.mxu0 0.0
    %280 = vmatpush1.msra.mxu0 0.0
    %281 = vmatprep.subr.mxu0 0.0
    %282 = vmatpush1.msra.mxu0 0.0
    %283 = vmatprep.subr.mxu0 0.0
    %284 = vmatpush1.msra.mxu0 0.0
    %285 = vmatprep.subr.mxu0 0.0
    %286 = vmatpush1.msra.mxu0 0.0
    %287 = vmatprep.subr.mxu0 0.0
    %288 = vmatpush1.msra.mxu0 0.0
    %289 = vmatprep.subr.mxu0 0.0
    %290 = vmatpush1.msra.mxu0 0.0
    %291 = vmatprep.subr.mxu0 0.0
    %292 = vmatpush1.msra.mxu0 0.0
    %293 = vmatprep.subr.mxu0 0.0
    %294 = vmatpush1.msra.mxu0 0.0
    %295 = vmatprep.mubr.f32.mxu0 0.0
    %296 = vmatmul.mubr.f32.gmra.mrb[0].mxu0 0.0
    %v297 = vpop.f32.mrb[0].mxu0
    %v298 = vadd.f32 0.0, %v297
    %v299 = vpop.f32.mrb[0].mxu0
    %300 = vdwg.mxu0
    %v301 = vadd.f32 %v177, %v298
    %v302 = vtanh.pop %v301
    %303 = vst [vmem:[#allocation2] sm:$0xff] %v302
    %304 = vmatprep.subr.mxu0 0.0
    %305 = vmatpush1.msra.mxu0 %v215
    %306 = vmatprep.subr.mxu0 0.0
    %307 = vmatpush1.msra.mxu0 %v216
    %308 = vmatprep.subr.mxu0 0.0
    %309 = vmatpush1.msra.mxu0 %v217
    %310 = vmatprep.subr.mxu0 0.0
    %311 = vmatpush1.msra.mxu0 %v218
    %312 = vmatprep.subr.mxu0 0.0
    %313 = vmatpush1.msra.mxu0 %v219
    %314 = vmatprep.subr.mxu0 0.0
    %315 = vmatpush1.msra.mxu0 %v220
    %316 = vmatprep.subr.mxu0 0.0
    %317 = vmatpush1.msra.mxu0 %v221
    %318 = vmatprep.subr.mxu0 0.0
    %319 = vmatpush1.msra.mxu0 %v222
    %320 = vmatprep.subr.mxu0 0.0
    %321 = vmatpush1.msra.mxu0 %v223
    %322 = vmatprep.subr.mxu0 0.0
    %323 = vmatpush1.msra.mxu0 %v224
    %324 = vmatprep.subr.mxu0 0.0
    %325 = vmatpush1.msra.mxu0 %v225
    %326 = vmatprep.subr.mxu0 0.0
    %327 = vmatpush1.msra.mxu0 %v226
    %328 = vmatprep.subr.mxu0 0.0
    %329 = vmatpush1.msra.mxu0 %v227
    %330 = vmatprep.subr.mxu0 0.0
    %331 = vmatpush1.msra.mxu0 %v228
    %332 = vmatprep.subr.mxu0 0.0
    %333 = vmatpush1.msra.mxu0 %v229
    %334 = vmatprep.subr.mxu0 0.0
    %335 = vmatpush1.msra.mxu0 %v230
    %336 = vmatprep.subr.mxu0 0.0
    %337 = vmatpush1.msra.mxu0 0.0
    %338 = vmatprep.subr.mxu0 0.0
    %339 = vmatpush1.msra.mxu0 0.0
    %340 = vmatprep.subr.mxu0 0.0
    %341 = vmatpush1.msra.mxu0 0.0
    %342 = vmatprep.subr.mxu0 0.0
    %343 = vmatpush1.msra.mxu0 0.0
    %344 = vmatprep.subr.mxu0 0.0
    %345 = vmatpush1.msra.mxu0 0.0
    %346 = vmatprep.subr.mxu0 0.0
    %347 = vmatpush1.msra.mxu0 0.0
    %348 = vmatprep.subr.mxu0 0.0
    %349 = vmatpush1.msra.mxu0 0.0
    %350 = vmatprep.subr.mxu0 0.0
    %351 = vmatpush1.msra.mxu0 0.0
    %352 = vmatprep.subr.mxu0 0.0
    %353 = vmatpush1.msra.mxu0 0.0
    %354 = vmatprep.subr.mxu0 0.0
    %355 = vmatpush1.msra.mxu0 0.0
    %356 = vmatprep.subr.mxu0 0.0
    %357 = vmatpush1.msra.mxu0 0.0
    %358 = vmatprep.subr.mxu0 0.0
    %359 = vmatpush1.msra.mxu0 0.0
    %360 = vmatprep.subr.mxu0 0.0
    %361 = vmatpush1.msra.mxu0 0.0
    %362 = vmatprep.subr.mxu0 0.0
    %363 = vmatpush1.msra.mxu0 0.0
    %364 = vmatprep.subr.mxu0 0.0
    %365 = vmatpush1.msra.mxu0 0.0
    %366 = vmatprep.subr.mxu0 0.0
    %367 = vmatpush1.msra.mxu0 0.0
    %368 = vmatprep.mubr.f32.mxu0 0.0
    %369 = vmatmul.mubr.f32.gmra.mrb[0].mxu0 %v302
    %v370 = vpop.f32.mrb[0].mxu0
    %v371 = vadd.f32 0.0, %v370
    %v372 = vpop.f32.mrb[0].mxu0
    %373 = vdwg.mxu0
    %v374 = vadd.f32 %v182, %v371
    %v375 = vtanh.pop %v374
    %376 = vst [vmem:[#allocation2 + $0x8] sm:$0xff] %v375
    %377 = vmatprep.subr.mxu0 0.0
    %378 = vmatpush1.msra.mxu0 %v215
    %379 = vmatprep.subr.mxu0 0.0
    %380 = vmatpush1.msra.mxu0 %v216
    %381 = vmatprep.subr.mxu0 0.0
    %382 = vmatpush1.msra.mxu0 %v217
    %383 = vmatprep.subr.mxu0 0.0
    %384 = vmatpush1.msra.mxu0 %v218
    %385 = vmatprep.subr.mxu0 0.0
    %386 = vmatpush1.msra.mxu0 %v219
    %387 = vmatprep.subr.mxu0 0.0
    %388 = vmatpush1.msra.mxu0 %v220
    %389 = vmatprep.subr.mxu0 0.0
    %390 = vmatpush1.msra.mxu0 %v221
    %391 = vmatprep.subr.mxu0 0.0
    %392 = vmatpush1.msra.mxu0 %v222
    %393 = vmatprep.subr.mxu0 0.0
    %394 = vmatpush1.msra.mxu0 %v223
    %395 = vmatprep.subr.mxu0 0.0
    %396 = vmatpush1.msra.mxu0 %v224
    %397 = vmatprep.subr.mxu0 0.0
    %398 = vmatpush1.msra.mxu0 %v225
    %399 = vmatprep.subr.mxu0 0.0
    %400 = vmatpush1.msra.mxu0 %v226
    %401 = vmatprep.subr.mxu0 0.0
    %402 = vmatpush1.msra.mxu0 %v227
    %403 = vmatprep.subr.mxu0 0.0
    %404 = vmatpush1.msra.mxu0 %v228
    %405 = vmatprep.subr.mxu0 0.0
    %406 = vmatpush1.msra.mxu0 %v229
    %407 = vmatprep.subr.mxu0 0.0
    %408 = vmatpush1.msra.mxu0 %v230
    %409 = vmatprep.subr.mxu0 0.0
    %410 = vmatpush1.msra.mxu0 0.0
    %411 = vmatprep.subr.mxu0 0.0
    %412 = vmatpush1.msra.mxu0 0.0
    %413 = vmatprep.subr.mxu0 0.0
    %414 = vmatpush1.msra.mxu0 0.0
    %415 = vmatprep.subr.mxu0 0.0
    %416 = vmatpush1.msra.mxu0 0.0
    %417 = vmatprep.subr.mxu0 0.0
    %418 = vmatpush1.msra.mxu0 0.0
    %419 = vmatprep.subr.mxu0 0.0
    %420 = vmatpush1.msra.mxu0 0.0
    %421 = vmatprep.subr.mxu0 0.0
    %422 = vmatpush1.msra.mxu0 0.0
    %423 = vmatprep.subr.mxu0 0.0
    %424 = vmatpush1.msra.mxu0 0.0
    %425 = vmatprep.subr.mxu0 0.0
    %426 = vmatpush1.msra.mxu0 0.0
    %427 = vmatprep.subr.mxu0 0.0
    %428 = vmatpush1.msra.mxu0 0.0
    %429 = vmatprep.subr.mxu0 0.0
    %430 = vmatpush1.msra.mxu0 0.0
    %431 = vmatprep.subr.mxu0 0.0
    %432 = vmatpush1.msra.mxu0 0.0
    %433 = vmatprep.subr.mxu0 0.0
    %434 = vmatpush1.msra.mxu0 0.0
    %435 = vmatprep.subr.mxu0 0.0
    %436 = vmatpush1.msra.mxu0 0.0
    %437 = vmatprep.subr.mxu0 0.0
    %438 = vmatpush1.msra.mxu0 0.0
    %439 = vmatprep.subr.mxu0 0.0
    %440 = vmatpush1.msra.mxu0 0.0
    %441 = vmatprep.mubr.f32.mxu0 0.0
    %442 = vmatmul.mubr.f32.gmra.mrb[0].mxu0 %v375
    %v443 = vpop.f32.mrb[0].mxu0
    %v444 = vadd.f32 0.0, %v443
    %v445 = vpop.f32.mrb[0].mxu0
    %446 = vdwg.mxu0
    %v447 = vadd.f32 %v187, %v444
    %v448 = vtanh.pop %v447
    %449 = vst [vmem:[#allocation2 + $0x10] sm:$0xff] %v448
    %450 = vmatprep.subr.mxu0 0.0
    %451 = vmatpush1.msra.mxu0 %v215
    %452 = vmatprep.subr.mxu0 0.0
    %453 = vmatpush1.msra.mxu0 %v216
    %454 = vmatprep.subr.mxu0 0.0
    %455 = vmatpush1.msra.mxu0 %v217
    %456 = vmatprep.subr.mxu0 0.0
    %457 = vmatpush1.msra.mxu0 %v218
    %458 = vmatprep.subr.mxu0 0.0
    %459 = vmatpush1.msra.mxu0 %v219
    %460 = vmatprep.subr.mxu0 0.0
    %461 = vmatpush1.msra.mxu0 %v220
    %462 = vmatprep.subr.mxu0 0.0
    %463 = vmatpush1.msra.mxu0 %v221
    %464 = vmatprep.subr.mxu0 0.0
    %465 = vmatpush1.msra.mxu0 %v222
    %466 = vmatprep.subr.mxu0 0.0
    %467 = vmatpush1.msra.mxu0 %v223
    %468 = vmatprep.subr.mxu0 0.0
    %469 = vmatpush1.msra.mxu0 %v224
    %470 = vmatprep.subr.mxu0 0.0
    %471 = vmatpush1.msra.mxu0 %v225
    %472 = vmatprep.subr.mxu0 0.0
    %473 = vmatpush1.msra.mxu0 %v226
    %474 = vmatprep.subr.mxu0 0.0
    %475 = vmatpush1.msra.mxu0 %v227
    %476 = vmatprep.subr.mxu0 0.0
    %477 = vmatpush1.msra.mxu0 %v228
    %478 = vmatprep.subr.mxu0 0.0
    %479 = vmatpush1.msra.mxu0 %v229
    %480 = vmatprep.subr.mxu0 0.0
    %481 = vmatpush1.msra.mxu0 %v230
    %482 = vmatprep.subr.mxu0 0.0
    %483 = vmatpush1.msra.mxu0 0.0
    %484 = vmatprep.subr.mxu0 0.0
    %485 = vmatpush1.msra.mxu0 0.0
    %486 = vmatprep.subr.mxu0 0.0
    %487 = vmatpush1.msra.mxu0 0.0
    %488 = vmatprep.subr.mxu0 0.0
    %489 = vmatpush1.msra.mxu0 0.0
    %490 = vmatprep.subr.mxu0 0.0
    %491 = vmatpush1.msra.mxu0 0.0
    %492 = vmatprep.subr.mxu0 0.0
    %493 = vmatpush1.msra.mxu0 0.0
    %494 = vmatprep.subr.mxu0 0.0
    %495 = vmatpush1.msra.mxu0 0.0
    %496 = vmatprep.subr.mxu0 0.0
    %497 = vmatpush1.msra.mxu0 0.0
    %498 = vmatprep.subr.mxu0 0.0
    %499 = vmatpush1.msra.mxu0 0.0
    %500 = vmatprep.subr.mxu0 0.0
    %501 = vmatpush1.msra.mxu0 0.0
    %502 = vmatprep.subr.mxu0 0.0
    %503 = vmatpush1.msra.mxu0 0.0
    %504 = vmatprep.subr.mxu0 0.0
    %505 = vmatpush1.msra.mxu0 0.0
    %506 = vmatprep.subr.mxu0 0.0
    %507 = vmatpush1.msra.mxu0 0.0
    %508 = vmatprep.subr.mxu0 0.0
    %509 = vmatpush1.msra.mxu0 0.0
    %510 = vmatprep.subr.mxu0 0.0
    %511 = vmatpush1.msra.mxu0 0.0
    %512 = vmatprep.subr.mxu0 0.0
    %513 = vmatpush1.msra.mxu0 0.0
    %514 = vmatprep.mubr.f32.mxu0 0.0
    %515 = vmatmul.mubr.f32.gmra.mrb[0].mxu0 %v448
    %v516 = vpop.f32.mrb[0].mxu0
    %v517 = vadd.f32 0.0, %v516
    %v518 = vpop.f32.mrb[0].mxu0
    %519 = vdwg.mxu0
    %v520 = vadd.f32 %v192, %v517
    %v521 = vtanh.pop %v520
    %522 = vst [vmem:[#allocation2 + $0x18] sm:$0xff] %v521
    %523 = vmatprep.subr.mxu0 0.0
    %524 = vmatpush1.msra.mxu0 %v215
    %525 = vmatprep.subr.mxu0 0.0
    %526 = vmatpush1.msra.mxu0 %v216
    %527 = vmatprep.subr.mxu0 0.0
    %528 = vmatpush1.msra.mxu0 %v217
    %529 = vmatprep.subr.mxu0 0.0
    %530 = vmatpush1.msra.mxu0 %v218
    %531 = vmatprep.subr.mxu0 0.0
    %532 = vmatpush1.msra.mxu0 %v219
    %533 = vmatprep.subr.mxu0 0.0
    %534 = vmatpush1.msra.mxu0 %v220
    %535 = vmatprep.subr.mxu0 0.0
    %536 = vmatpush1.msra.mxu0 %v221
    %537 = vmatprep.subr.mxu0 0.0
    %538 = vmatpush1.msra.mxu0 %v222
    %539 = vmatprep.subr.mxu0 0.0
    %540 = vmatpush1.msra.mxu0 %v223
    %541 = vmatprep.subr.mxu0 0.0
    %542 = vmatpush1.msra.mxu0 %v224
    %543 = vmatprep.subr.mxu0 0.0
    %544 = vmatpush1.msra.mxu0 %v225
    %545 = vmatprep.subr.mxu0 0.0
    %546 = vmatpush1.msra.mxu0 %v226
    %547 = vmatprep.subr.mxu0 0.0
    %548 = vmatpush1.msra.mxu0 %v227
    %549 = vmatprep.subr.mxu0 0.0
    %550 = vmatpush1.msra.mxu0 %v228
    %551 = vmatprep.subr.mxu0 0.0
    %552 = vmatpush1.msra.mxu0 %v229
    %553 = vmatprep.subr.mxu0 0.0
    %554 = vmatpush1.msra.mxu0 %v230
    %555 = vmatprep.subr.mxu0 0.0
    %556 = vmatpush1.msra.mxu0 0.0
    %557 = vmatprep.subr.mxu0 0.0
    %558 = vmatpush1.msra.mxu0 0.0
    %559 = vmatprep.subr.mxu0 0.0
    %560 = vmatpush1.msra.mxu0 0.0
    %561 = vmatprep.subr.mxu0 0.0
    %562 = vmatpush1.msra.mxu0 0.0
    %563 = vmatprep.subr.mxu0 0.0
    %564 = vmatpush1.msra.mxu0 0.0
    %565 = vmatprep.subr.mxu0 0.0
    %566 = vmatpush1.msra.mxu0 0.0
    %567 = vmatprep.subr.mxu0 0.0
    %568 = vmatpush1.msra.mxu0 0.0
    %569 = vmatprep.subr.mxu0 0.0
    %570 = vmatpush1.msra.mxu0 0.0
    %571 = vmatprep.subr.mxu0 0.0
    %572 = vmatpush1.msra.mxu0 0.0
    %573 = vmatprep.subr.mxu0 0.0
    %574 = vmatpush1.msra.mxu0 0.0
    %575 = vmatprep.subr.mxu0 0.0
    %576 = vmatpush1.msra.mxu0 0.0
    %577 = vmatprep.subr.mxu0 0.0
    %578 = vmatpush1.msra.mxu0 0.0
    %579 = vmatprep.subr.mxu0 0.0
    %580 = vmatpush1.msra.mxu0 0.0
    %581 = vmatprep.subr.mxu0 0.0
    %582 = vmatpush1.msra.mxu0 0.0
    %583 = vmatprep.subr.mxu0 0.0
    %584 = vmatpush1.msra.mxu0 0.0
    %585 = vmatprep.subr.mxu0 0.0
    %586 = vmatpush1.msra.mxu0 0.0
    %587 = vmatprep.mubr.f32.mxu0 0.0
    %588 = vmatmul.mubr.f32.gmra.mrb[0].mxu0 %v521
    %v589 = vpop.f32.mrb[0].mxu0
    %v590 = vadd.f32 0.0, %v589
    %v591 = vpop.f32.mrb[0].mxu0
    %592 = vdwg.mxu0
    %v593 = vadd.f32 %v197, %v590
    %v594 = vtanh.pop %v593
    %595 = vst [vmem:[#allocation2 + $0x20] sm:$0xff] %v594
    %596 = vmatprep.subr.mxu0 0.0
    %597 = vmatpush1.msra.mxu0 %v215
    %598 = vmatprep.subr.mxu0 0.0
    %599 = vmatpush1.msra.mxu0 %v216
    %600 = vmatprep.subr.mxu0 0.0
    %601 = vmatpush1.msra.mxu0 %v217
    %602 = vmatprep.subr.mxu0 0.0
    %603 = vmatpush1.msra.mxu0 %v218
    %604 = vmatprep.subr.mxu0 0.0
    %605 = vmatpush1.msra.mxu0 %v219
    %606 = vmatprep.subr.mxu0 0.0
    %607 = vmatpush1.msra.mxu0 %v220
    %608 = vmatprep.subr.mxu0 0.0
    %609 = vmatpush1.msra.mxu0 %v221
    %610 = vmatprep.subr.mxu0 0.0
    %611 = vmatpush1.msra.mxu0 %v222
    %612 = vmatprep.subr.mxu0 0.0
    %613 = vmatpush1.msra.mxu0 %v223
    %614 = vmatprep.subr.mxu0 0.0
    %615 = vmatpush1.msra.mxu0 %v224
    %616 = vmatprep.subr.mxu0 0.0
    %617 = vmatpush1.msra.mxu0 %v225
    %618 = vmatprep.subr.mxu0 0.0
    %619 = vmatpush1.msra.mxu0 %v226
    %620 = vmatprep.subr.mxu0 0.0
    %621 = vmatpush1.msra.mxu0 %v227
    %622 = vmatprep.subr.mxu0 0.0
    %623 = vmatpush1.msra.mxu0 %v228
    %624 = vmatprep.subr.mxu0 0.0
    %625 = vmatpush1.msra.mxu0 %v229
    %626 = vmatprep.subr.mxu0 0.0
    %627 = vmatpush1.msra.mxu0 %v230
    %628 = vmatprep.subr.mxu0 0.0
    %629 = vmatpush1.msra.mxu0 0.0
    %630 = vmatprep.subr.mxu0 0.0
    %631 = vmatpush1.msra.mxu0 0.0
    %632 = vmatprep.subr.mxu0 0.0
    %633 = vmatpush1.msra.mxu0 0.0
    %634 = vmatprep.subr.mxu0 0.0
    %635 = vmatpush1.msra.mxu0 0.0
    %636 = vmatprep.subr.mxu0 0.0
    %637 = vmatpush1.msra.mxu0 0.0
    %638 = vmatprep.subr.mxu0 0.0
    %639 = vmatpush1.msra.mxu0 0.0
    %640 = vmatprep.subr.mxu0 0.0
    %641 = vmatpush1.msra.mxu0 0.0
    %642 = vmatprep.subr.mxu0 0.0
    %643 = vmatpush1.msra.mxu0 0.0
    %644 = vmatprep.subr.mxu0 0.0
    %645 = vmatpush1.msra.mxu0 0.0
    %646 = vmatprep.subr.mxu0 0.0
    %647 = vmatpush1.msra.mxu0 0.0
    %648 = vmatprep.subr.mxu0 0.0
    %649 = vmatpush1.msra.mxu0 0.0
    %650 = vmatprep.subr.mxu0 0.0
    %651 = vmatpush1.msra.mxu0 0.0
    %652 = vmatprep.subr.mxu0 0.0
    %653 = vmatpush1.msra.mxu0 0.0
    %654 = vmatprep.subr.mxu0 0.0
    %655 = vmatpush1.msra.mxu0 0.0
    %656 = vmatprep.subr.mxu0 0.0
    %657 = vmatpush1.msra.mxu0 0.0
    %658 = vmatprep.subr.mxu0 0.0
    %659 = vmatpush1.msra.mxu0 0.0
    %660 = vmatprep.mubr.f32.mxu0 0.0
    %661 = vmatmul.mubr.f32.gmra.mrb[0].mxu0 %v594
    %v662 = vpop.f32.mrb[0].mxu0
    %v663 = vadd.f32 0.0, %v662
    %v664 = vpop.f32.mrb[0].mxu0
    %665 = vdwg.mxu0
    %v666 = vadd.f32 %v202, %v663
    %v667 = vtanh.pop %v666
    %668 = vst [vmem:[#allocation2 + $0x28] sm:$0xff] %v667
    %669 = vmatprep.subr.mxu0 0.0
    %670 = vmatpush1.msra.mxu0 %v215
    %671 = vmatprep.subr.mxu0 0.0
    %672 = vmatpush1.msra.mxu0 %v216
    %673 = vmatprep.subr.mxu0 0.0
    %674 = vmatpush1.msra.mxu0 %v217
    %675 = vmatprep.subr.mxu0 0.0
    %676 = vmatpush1.msra.mxu0 %v218
    %677 = vmatprep.subr.mxu0 0.0
    %678 = vmatpush1.msra.mxu0 %v219
    %679 = vmatprep.subr.mxu0 0.0
    %680 = vmatpush1.msra.mxu0 %v220
    %681 = vmatprep.subr.mxu0 0.0
    %682 = vmatpush1.msra.mxu0 %v221
    %683 = vmatprep.subr.mxu0 0.0
    %684 = vmatpush1.msra.mxu0 %v222
    %685 = vmatprep.subr.mxu0 0.0
    %686 = vmatpush1.msra.mxu0 %v223
    %687 = vmatprep.subr.mxu0 0.0
    %688 = vmatpush1.msra.mxu0 %v224
    %689 = vmatprep.subr.mxu0 0.0
    %690 = vmatpush1.msra.mxu0 %v225
    %691 = vmatprep.subr.mxu0 0.0
    %692 = vmatpush1.msra.mxu0 %v226
    %693 = vmatprep.subr.mxu0 0.0
    %694 = vmatpush1.msra.mxu0 %v227
    %695 = vmatprep.subr.mxu0 0.0
    %696 = vmatpush1.msra.mxu0 %v228
    %697 = vmatprep.subr.mxu0 0.0
    %698 = vmatpush1.msra.mxu0 %v229
    %699 = vmatprep.subr.mxu0 0.0
    %700 = vmatpush1.msra.mxu0 %v230
    %701 = vmatprep.subr.mxu0 0.0
    %702 = vmatpush1.msra.mxu0 0.0
    %703 = vmatprep.subr.mxu0 0.0
    %704 = vmatpush1.msra.mxu0 0.0
    %705 = vmatprep.subr.mxu0 0.0
    %706 = vmatpush1.msra.mxu0 0.0
    %707 = vmatprep.subr.mxu0 0.0
    %708 = vmatpush1.msra.mxu0 0.0
    %709 = vmatprep.subr.mxu0 0.0
    %710 = vmatpush1.msra.mxu0 0.0
    %711 = vmatprep.subr.mxu0 0.0
    %712 = vmatpush1.msra.mxu0 0.0
    %713 = vmatprep.subr.mxu0 0.0
    %714 = vmatpush1.msra.mxu0 0.0
    %715 = vmatprep.subr.mxu0 0.0
    %716 = vmatpush1.msra.mxu0 0.0
    %717 = vmatprep.subr.mxu0 0.0
    %718 = vmatpush1.msra.mxu0 0.0
    %719 = vmatprep.subr.mxu0 0.0
    %720 = vmatpush1.msra.mxu0 0.0
    %721 = vmatprep.subr.mxu0 0.0
    %722 = vmatpush1.msra.mxu0 0.0
    %723 = vmatprep.subr.mxu0 0.0
    %724 = vmatpush1.msra.mxu0 0.0
    %725 = vmatprep.subr.mxu0 0.0
    %726 = vmatpush1.msra.mxu0 0.0
    %727 = vmatprep.subr.mxu0 0.0
    %728 = vmatpush1.msra.mxu0 0.0
    %729 = vmatprep.subr.mxu0 0.0
    %730 = vmatpush1.msra.mxu0 0.0
    %731 = vmatprep.subr.mxu0 0.0
    %732 = vmatpush1.msra.mxu0 0.0
    %733 = vmatprep.mubr.f32.mxu0 0.0
    %734 = vmatmul.mubr.f32.gmra.mrb[0].mxu0 %v667
    %v735 = vpop.f32.mrb[0].mxu0
    %v736 = vadd.f32 0.0, %v735
    %v737 = vpop.f32.mrb[0].mxu0
    %738 = vdwg.mxu0
    %v739 = vadd.f32 %v207, %v736
    %v740 = vtanh.pop %v739
    %741 = vst [vmem:[#allocation2 + $0x30] sm:$0xff] %v740
    %742 = vmatprep.subr.mxu0 0.0
    %743 = vmatpush1.msra.mxu0 %v215
    %744 = vmatprep.subr.mxu0 0.0
    %745 = vmatpush1.msra.mxu0 %v216
    %746 = vmatprep.subr.mxu0 0.0
    %747 = vmatpush1.msra.mxu0 %v217
    %748 = vmatprep.subr.mxu0 0.0
    %749 = vmatpush1.msra.mxu0 %v218
    %750 = vmatprep.subr.mxu0 0.0
    %751 = vmatpush1.msra.mxu0 %v219
    %752 = vmatprep.subr.mxu0 0.0
    %753 = vmatpush1.msra.mxu0 %v220
    %754 = vmatprep.subr.mxu0 0.0
    %755 = vmatpush1.msra.mxu0 %v221
    %756 = vmatprep.subr.mxu0 0.0
    %757 = vmatpush1.msra.mxu0 %v222
    %758 = vmatprep.subr.mxu0 0.0
    %759 = vmatpush1.msra.mxu0 %v223
    %760 = vmatprep.subr.mxu0 0.0
    %761 = vmatpush1.msra.mxu0 %v224
    %762 = vmatprep.subr.mxu0 0.0
    %763 = vmatpush1.msra.mxu0 %v225
    %764 = vmatprep.subr.mxu0 0.0
    %765 = vmatpush1.msra.mxu0 %v226
    %766 = vmatprep.subr.mxu0 0.0
    %767 = vmatpush1.msra.mxu0 %v227
    %768 = vmatprep.subr.mxu0 0.0
    %769 = vmatpush1.msra.mxu0 %v228
    %770 = vmatprep.subr.mxu0 0.0
    %771 = vmatpush1.msra.mxu0 %v229
    %772 = vmatprep.subr.mxu0 0.0
    %773 = vmatpush1.msra.mxu0 %v230
    %774 = vmatprep.subr.mxu0 0.0
    %775 = vmatpush1.msra.mxu0 0.0
    %776 = vmatprep.subr.mxu0 0.0
    %777 = vmatpush1.msra.mxu0 0.0
    %778 = vmatprep.subr.mxu0 0.0
    %779 = vmatpush1.msra.mxu0 0.0
    %780 = vmatprep.subr.mxu0 0.0
    %781 = vmatpush1.msra.mxu0 0.0
    %782 = vmatprep.subr.mxu0 0.0
    %783 = vmatpush1.msra.mxu0 0.0
    %784 = vmatprep.subr.mxu0 0.0
    %785 = vmatpush1.msra.mxu0 0.0
    %786 = vmatprep.subr.mxu0 0.0
    %787 = vmatpush1.msra.mxu0 0.0
    %788 = vmatprep.subr.mxu0 0.0
    %789 = vmatpush1.msra.mxu0 0.0
    %790 = vmatprep.subr.mxu0 0.0
    %791 = vmatpush1.msra.mxu0 0.0
    %792 = vmatprep.subr.mxu0 0.0
    %793 = vmatpush1.msra.mxu0 0.0
    %794 = vmatprep.subr.mxu0 0.0
    %795 = vmatpush1.msra.mxu0 0.0
    %796 = vmatprep.subr.mxu0 0.0
    %797 = vmatpush1.msra.mxu0 0.0
    %798 = vmatprep.subr.mxu0 0.0
    %799 = vmatpush1.msra.mxu0 0.0
    %800 = vmatprep.subr.mxu0 0.0
    %801 = vmatpush1.msra.mxu0 0.0
    %802 = vmatprep.subr.mxu0 0.0
    %803 = vmatpush1.msra.mxu0 0.0
    %804 = vmatprep.subr.mxu0 0.0
    %805 = vmatpush1.msra.mxu0 0.0
    %806 = vmatprep.mubr.f32.mxu0 0.0
    %807 = vmatmul.mubr.f32.gmra.mrb[0].mxu0 %v740
    %v808 = vpop.f32.mrb[0].mxu0
    %v809 = vadd.f32 0.0, %v808
    %v810 = vpop.f32.mrb[0].mxu0
    %811 = vdwg.mxu0
    %v812 = vadd.f32 %v212, %v809
    %v813 = vtanh.pop %v812
    %814 = vst [vmem:[#allocation2 + $0x38] sm:$0xff] %v813
    %v815 = vld [vmem:[#allocation2] sm:$0xff]
    %v816 = vld [vmem:[#allocation2 + $0x8] sm:$0xff]
    %v817 = vld [vmem:[#allocation2 + $0x10] sm:$0xff]
    %v818 = vld [vmem:[#allocation2 + $0x18] sm:$0xff]
    %v819 = vld [vmem:[#allocation2 + $0x20] sm:$0xff]
    %v820 = vld [vmem:[#allocation2 + $0x28] sm:$0xff]
    %v821 = vld [vmem:[#allocation2 + $0x30] sm:$0xff]
    %v822 = vld [vmem:[#allocation2 + $0x38] sm:$0xff]
    %v823 = vld [vmem:[#allocation9] sm:$0xff]
    %v824 = vld [vmem:[#allocation9 + $0x8] sm:$0xff]
    %v825 = vld [vmem:[#allocation9 + $0x10] sm:$0xff]
    %v826 = vld [vmem:[#allocation9 + $0x18] sm:$0xff]
    %v827 = vld [vmem:[#allocation9 + $0x20] sm:$0xff]
    %v828 = vld [vmem:[#allocation9 + $0x28] sm:$0xff]
    %v829 = vld [vmem:[#allocation9 + $0x30] sm:$0xff]
    %v830 = vld [vmem:[#allocation9 + $0x38] sm:$0xff]
    %v831 = vld [vmem:[#allocation9 + $0x40] sm:$0xff]
    %v832 = vld [vmem:[#allocation9 + $0x48] sm:$0xff]
    %v833 = vld [vmem:[#allocation9 + $0x50] sm:$0xff]
    %v834 = vld [vmem:[#allocation9 + $0x58] sm:$0xff]
    %v835 = vld [vmem:[#allocation9 + $0x60] sm:$0xff]
    %v836 = vld [vmem:[#allocation9 + $0x68] sm:$0xff]
    %v837 = vld [vmem:[#allocation9 + $0x70] sm:$0xff]
    %v838 = vld [vmem:[#allocation9 + $0x78] sm:$0xff]
    %v839 = vld [vmem:[%s5] sm:$0x1]
    %v841 = vlaneseq
    %v842 = vshrl.u32 %v841, 7
    %v843 = vsub.s32 0, %v842
    %v844 = vrot.slane %v839, %v843
    %846 = vmatprep.subr.mxu0 0.0
    %847 = vmatpush1.msra.mxu0 %v823
    %848 = vmatprep.subr.mxu0 0.0
    %849 = vmatpush1.msra.mxu0 %v824
    %850 = vmatprep.subr.mxu0 0.0
    %851 = vmatpush1.msra.mxu0 %v825
    %852 = vmatprep.subr.mxu0 0.0
    %853 = vmatpush1.msra.mxu0 %v826
    %854 = vmatprep.subr.mxu0 0.0
    %855 = vmatpush1.msra.mxu0 %v827
    %856 = vmatprep.subr.mxu0 0.0
    %857 = vmatpush1.msra.mxu0 %v828
    %858 = vmatprep.subr.mxu0 0.0
    %859 = vmatpush1.msra.mxu0 %v829
    %860 = vmatprep.subr.mxu0 0.0
    %861 = vmatpush1.msra.mxu0 %v830
    %862 = vmatprep.subr.mxu0 0.0
    %863 = vmatpush1.msra.mxu0 %v831
    %864 = vmatprep.subr.mxu0 0.0
    %865 = vmatpush1.msra.mxu0 %v832
    %866 = vmatprep.subr.mxu0 0.0
    %867 = vmatpush1.msra.mxu0 %v833
    %868 = vmatprep.subr.mxu0 0.0
    %869 = vmatpush1.msra.mxu0 %v834
    %870 = vmatprep.subr.mxu0 0.0
    %871 = vmatpush1.msra.mxu0 %v835
    %872 = vmatprep.subr.mxu0 0.0
    %873 = vmatpush1.msra.mxu0 %v836
    %874 = vmatprep.subr.mxu0 0.0
    %875 = vmatpush1.msra.mxu0 %v837
    %876 = vmatprep.subr.mxu0 0.0
    %877 = vmatpush1.msra.mxu0 %v838
    %878 = vmatprep.subr.mxu0 0.0
    %879 = vmatpush1.msra.mxu0 0.0
    %880 = vmatprep.subr.mxu0 0.0
    %881 = vmatpush1.msra.mxu0 0.0
    %882 = vmatprep.subr.mxu0 0.0
    %883 = vmatpush1.msra.mxu0 0.0
    %884 = vmatprep.subr.mxu0 0.0
    %885 = vmatpush1.msra.mxu0 0.0
    %886 = vmatprep.subr.mxu0 0.0
    %887 = vmatpush1.msra.mxu0 0.0
    %888 = vmatprep.subr.mxu0 0.0
    %889 = vmatpush1.msra.mxu0 0.0
    %890 = vmatprep.subr.mxu0 0.0
    %891 = vmatpush1.msra.mxu0 0.0
    %892 = vmatprep.subr.mxu0 0.0
    %893 = vmatpush1.msra.mxu0 0.0
    %894 = vmatprep.subr.mxu0 0.0
    %895 = vmatpush1.msra.mxu0 0.0
    %896 = vmatprep.subr.mxu0 0.0
    %897 = vmatpush1.msra.mxu0 0.0
    %898 = vmatprep.subr.mxu0 0.0
    %899 = vmatpush1.msra.mxu0 0.0
    %900 = vmatprep.subr.mxu0 0.0
    %901 = vmatpush1.msra.mxu0 0.0
    %902 = vmatprep.subr.mxu0 0.0
    %903 = vmatpush1.msra.mxu0 0.0
    %904 = vmatprep.subr.mxu0 0.0
    %905 = vmatpush1.msra.mxu0 0.0
    %906 = vmatprep.subr.mxu0 0.0
    %907 = vmatpush1.msra.mxu0 0.0
    %908 = vmatprep.subr.mxu0 0.0
    %909 = vmatpush1.msra.mxu0 0.0
    %910 = vmatprep.mubr.f32.mxu0 0.0
    %911 = vmatmul.mubr.f32.gmra.mrb[0].mxu0 %v815
    %v912 = vpop.f32.mrb[0].mxu0
    %v913 = vadd.f32 %v844, %v912
    %v914 = vpop.f32.mrb[0].mxu0
    %915 = vmatprep.mubr.f32.mxu0 0.0
    %916 = vmatmul.mubr.f32.gmra.mrb[0].mxu0 %v816
    %v917 = vpop.f32.mrb[0].mxu0
    %v918 = vadd.f32 %v844, %v917
    %v919 = vpop.f32.mrb[0].mxu0
    %920 = vmatprep.mubr.f32.mxu0 0.0
    %921 = vmatmul.mubr.f32.gmra.mrb[0].mxu0 %v817
    %v922 = vpop.f32.mrb[0].mxu0
    %v923 = vadd.f32 %v844, %v922
    %v924 = vpop.f32.mrb[0].mxu0
    %925 = vmatprep.mubr.f32.mxu0 0.0
    %926 = vmatmul.mubr.f32.gmra.mrb[0].mxu0 %v818
    %v927 = vpop.f32.mrb[0].mxu0
    %v928 = vadd.f32 %v844, %v927
    %v929 = vpop.f32.mrb[0].mxu0
    %930 = vmatprep.mubr.f32.mxu0 0.0
    %931 = vmatmul.mubr.f32.gmra.mrb[0].mxu0 %v819
    %v932 = vpop.f32.mrb[0].mxu0
    %v933 = vadd.f32 %v844, %v932
    %v934 = vpop.f32.mrb[0].mxu0
    %935 = vmatprep.mubr.f32.mxu0 0.0
    %936 = vmatmul.mubr.f32.gmra.mrb[0].mxu0 %v820
    %v937 = vpop.f32.mrb[0].mxu0
    %v938 = vadd.f32 %v844, %v937
    %v939 = vpop.f32.mrb[0].mxu0
    %940 = vmatprep.mubr.f32.mxu0 0.0
    %941 = vmatmul.mubr.f32.gmra.mrb[0].mxu0 %v821
    %v942 = vpop.f32.mrb[0].mxu0
    %v943 = vadd.f32 %v844, %v942
    %v944 = vpop.f32.mrb[0].mxu0
    %945 = vmatprep.mubr.f32.mxu0 0.0
    %946 = vmatmul.mubr.f32.gmra.mrb[0].mxu0 %v822
    %v947 = vpop.f32.mrb[0].mxu0
    %v948 = vadd.f32 %v844, %v947
    %v949 = vpop.f32.mrb[0].mxu0
    %950 = vdwg.mxu0
    %951 = vst [vmem:[#allocation11] sm:$0xff] %v913
    %952 = vst [vmem:[#allocation11 + $0x8] sm:$0xff] %v918
    %953 = vst [vmem:[#allocation11 + $0x10] sm:$0xff] %v923
    %954 = vst [vmem:[#allocation11 + $0x18] sm:$0xff] %v928
    %955 = vst [vmem:[#allocation11 + $0x20] sm:$0xff] %v933
    %956 = vst [vmem:[#allocation11 + $0x28] sm:$0xff] %v938
    %957 = vst [vmem:[#allocation11 + $0x30] sm:$0xff] %v943
    %958 = vst [vmem:[#allocation11 + $0x38] sm:$0xff] %v948
    // Predicated region
    $region42: #{tpu_custom_call.1} parent=1 // pred_check
      _
    $region43: #{tpu_custom_call.1} parent=1 // pred_check_branch
      %960 = sbr.rel (0) target = $region45
    $region44: #{tpu_custom_call.1} parent=1 // pred_region
      %s962 = ssub.s32 1024, 1024
      %963 = vsyncadd [#allocation5], %s962
      %s964 = sshll.u32 [#allocation11], 4
      %s965 = int_to_ptr.vmem [resolvable:$true] %s964
      %970 = dma.vmem_to_hbm [thread:$0]  %s965, 1024, %s6, [#allocation5], 128, 128, 8
    $region45: #{tpu_custom_call.1} parent=1 // pred_fallthru
      _
    // Predicated region
    $region46: #{tpu_custom_call.1} parent=1 // pred_check
      _
    $region47: #{tpu_custom_call.1} parent=1 // pred_check_branch
      %972 = sbr.rel (0) target = $region49
    $region48: #{tpu_custom_call.1} parent=1 // pred_region
      %973 = dma.done [#allocation5], 1024
    $region49: #{tpu_custom_call.1} parent=1 // pred_fallthru
      _
    %974 = vsyncpa [#allocation4], 1
    %975 = vsyncpa [#allocation7], 1
    %976 = vsyncpa [#allocation10], 1
    %977 = vsyncpa [#allocation5], 1

</llo_original>
